<compile_context>
chip_gen: v6e
topology: v6e:2x2x1
jax: 0.10.0
libtpu: 0.0.40
codegen_flags: <defaults>
</compile_context>

<pallas_src>
import jax
import jax.numpy as jnp
from jax.experimental import pallas as pl
from jax.experimental.pallas import tpu as pltpu


def weighted_sum_kernel(x_ref, w_ref, o_ref):
    # x_ref: (B, S, D) VMEM, w_ref: (1, D) VMEM, o_ref: (B, D) VMEM. All f32.
    w = w_ref[...]                                              # (1, D)

    # Linear(word_dim, 1) WITHOUT bias: scores[b, s] = x[b, s, :] . w
    # (bias cancels exactly in the softmax over seq -- see module-level note)
    scores = jnp.sum(x_ref[...] * w, axis=-1, keepdims=True)    # (B, S, 1)

    # softmax over the sequence axis, normalization deferred:
    m = jnp.max(scores, axis=1, keepdims=True)                  # (B, 1, 1)
    e = jnp.exp(scores - m)                                     # (B, S, 1) unnormalized
    denom = jnp.sum(e, axis=1)                                  # (B, 1)

    # bmm(x^T, weights).squeeze(2) with the normalization pulled out:
    #   out[b, d] = (sum_s e[b, s] * x[b, s, d]) / denom[b]
    acc = jnp.sum(x_ref[...] * e, axis=1)                       # (B, D)

    # exact divide on a (B, D)/(B, 1) op -- 1-2 vregs, negligible cost
    o_ref[...] = (acc / denom).astype(o_ref.dtype)


def weighted_sum(x, w, b=None):
    """x: (B, S, D), w: (1, D) Linear weight, b: (1, 1) Linear bias -> (B, D).

    `b` is accepted to mirror nn.Linear but is NOT used: with out_features == 1
    the bias is a per-(batch, seq)-constant shift of the scores, which the
    softmax over the seq axis cancels exactly, so it has no effect on the output.
    """
    del b  # mathematically dead (softmax shift-invariance)
    B, S, D = x.shape
    return pl.pallas_call(
        weighted_sum_kernel,
        out_shape=jax.ShapeDtypeStruct((B, D), x.dtype),
        # No grid: single invocation, whole arrays resident in VMEM (40 KB).
        in_specs=[
            pl.BlockSpec(memory_space=pltpu.MemorySpace.VMEM),   # x
            pl.BlockSpec(memory_space=pltpu.MemorySpace.VMEM),   # w
        ],
        out_specs=pl.BlockSpec(memory_space=pltpu.MemorySpace.VMEM),
    )(x, w)


def weighted_sum_ref(x, w, b):
    # pure-JAX reference reproducing the PyTorch forward (bias included)
    scores = jnp.einsum("bsd,od->bso", x, w) + b[0, 0]      # (B, S, 1)
    weights = jax.nn.softmax(scores, axis=1)                # softmax over seq
    res = jnp.einsum("bsd,bso->bdo", x, weights)            # bmm(x^T, weights)
    return res[..., 0]                                      # squeeze(2) -> (B, D)


if __name__ == "__main__":
    batch, seq_len, word_dim = 10, 20, 50

    key = jax.random.PRNGKey(0)
    kx, kw, kb = jax.random.split(key, 3)

    x = jax.random.normal(kx, (batch, seq_len, word_dim), dtype=jnp.float32)

    # deterministic init of nn.Linear(word_dim, 1): weight (1, word_dim), bias (1, 1)
    bound = 1.0 / (word_dim ** 0.5)
    w = jax.random.uniform(kw, (1, word_dim), jnp.float32, -bound, bound)
    b = jax.random.uniform(kb, (1, 1), jnp.float32, -bound, bound)

    out = weighted_sum(x, w, b)
    jax.block_until_ready(out)

    ref = weighted_sum_ref(x, w, b)
    assert out.shape == (batch, word_dim)
    assert jnp.allclose(out, ref, atol=1e-5, rtol=1e-5), \
        float(jnp.max(jnp.abs(out - ref)))

    print("KERNEL_OK")
</pallas_src>

<mosaic_0001>
module attributes {stable_mosaic.version = 11 : i64} {
  func.func @weighted_sum_kernel(%arg0: memref<10x20x50xf32, #tpu.memory_space<vmem>>, %arg1: memref<1x50xf32, #tpu.memory_space<vmem>>, %arg2: memref<10x50xf32, #tpu.memory_space<vmem>>) attributes {dimension_semantics = [], scalar_prefetch = 0 : i64, scratch_operands = 0 : i64, tpu.core_type = #tpu.core_type<tc>} {
    %c0 = arith.constant 0 : index
    %c0_0 = arith.constant 0 : index
    %0 = vector.load %arg1[%c0, %c0_0] : memref<1x50xf32, #tpu.memory_space<vmem>>, vector<1x50xf32>
    %c0_1 = arith.constant 0 : index
    %c0_2 = arith.constant 0 : index
    %c0_3 = arith.constant 0 : index
    %1 = vector.load %arg0[%c0_1, %c0_2, %c0_3] : memref<10x20x50xf32, #tpu.memory_space<vmem>>, vector<10x20x50xf32>
    %2 = vector.shape_cast %0 : vector<1x50xf32> to vector<1x1x50xf32>
    %3 = vector.broadcast %2 : vector<1x1x50xf32> to vector<10x20x50xf32>
    %4 = arith.mulf %1, %3 : vector<10x20x50xf32>
    %cst = arith.constant dense<0.000000e+00> : vector<10x20xf32>
    %5 = vector.multi_reduction <add>, %4, %cst [2] : vector<10x20x50xf32> to vector<10x20xf32>
    %6 = vector.shape_cast %5 : vector<10x20xf32> to vector<10x20x1xf32>
    %cst_4 = arith.constant dense<0xFF800000> : vector<10x1xf32>
    %7 = vector.multi_reduction <maximumf>, %6, %cst_4 [1] : vector<10x20x1xf32> to vector<10x1xf32>
    %8 = vector.shape_cast %7 : vector<10x1xf32> to vector<10x1x1xf32>
    %9 = vector.broadcast %8 : vector<10x1x1xf32> to vector<10x20x1xf32>
    %10 = arith.subf %6, %9 : vector<10x20x1xf32>
    %11 = math.exp %10 : vector<10x20x1xf32>
    %cst_5 = arith.constant dense<0.000000e+00> : vector<10x1xf32>
    %12 = vector.multi_reduction <add>, %11, %cst_5 [1] : vector<10x20x1xf32> to vector<10x1xf32>
    %c0_6 = arith.constant 0 : index
    %c0_7 = arith.constant 0 : index
    %c0_8 = arith.constant 0 : index
    %13 = vector.load %arg0[%c0_6, %c0_7, %c0_8] : memref<10x20x50xf32, #tpu.memory_space<vmem>>, vector<10x20x50xf32>
    %14 = vector.broadcast %11 : vector<10x20x1xf32> to vector<10x20x50xf32>
    %15 = arith.mulf %13, %14 : vector<10x20x50xf32>
    %cst_9 = arith.constant dense<0.000000e+00> : vector<10x50xf32>
    %16 = vector.multi_reduction <add>, %15, %cst_9 [1] : vector<10x20x50xf32> to vector<10x50xf32>
    %17 = vector.broadcast %12 : vector<10x1xf32> to vector<10x50xf32>
    %18 = arith.divf %16, %17 : vector<10x50xf32>
    %c0_10 = arith.constant 0 : index
    %c0_11 = arith.constant 0 : index
    %19 = vector.load %arg2[%c0_10, %c0_11] : memref<10x50xf32, #tpu.memory_space<vmem>>, vector<10x50xf32>
    tpu.vector_store %arg2[%c0_10, %c0_11], %18 {strides = array<i32>} : memref<10x50xf32, #tpu.memory_space<vmem>>, vector<10x50xf32>,
    return
  }
}

</mosaic_0001>

<llo_original>
// kernel: tpu_custom_call.1
$region0: #{tpu_custom_call.1}
  #allocation0 [shape = 'u32[]', space=smem, size = 0x4, offset = 0x4, fixed_abs, tag = 'smem constant byte address 0x4 - core index']
  #allocation1 [shape = 'u32[144,128]{1,0:T(1,128)}', space=vmem, size = 0x12000, scoped, tag = 'internal scratch']
  %s0 = inlined_call_operand.hbm [shape: f32[10,20,50], index: 0, kind: input, shape index: {}]
  %s1 = inlined_call_operand.vmem [shape: f32[1,50], index: 1, kind: input, shape index: {}]
  %s2 = inlined_call_operand.hbm [shape: f32[10,50], index: 2, kind: output, shape index: {}]
  %s3 = sld [smem:[#allocation0]]
  $region22: #{tpu_custom_call.1} parent=0
    _
  %s5 = ssub.s32 1, %s3
  %s6 = scalar_select 0, %s5, %s3
  $region1: #{tpu_custom_call.1} parent=0
    #allocation2 [shape = 'u8[122880]{0}', space=vmem, size = 0x1e000, scoped, tag = 'input window, operand 0, single buffered']
    #allocation3 [shape = 's32[1]{0}', space=sflag, size = 0x4, scoped, tag = 'scoped memory for tpu_custom_call.1']
    #allocation4 [shape = 's32[1]{0}', space=sflag, size = 0x4, scoped, tag = 'scoped memory for tpu_custom_call.1']
    #allocation5 [shape = 'u8[8192]{0}', space=vmem, size = 0x2000, scoped, tag = 'output window, operand 0, single buffered']
    %7 = vsyncpa [#allocation3], 0
    %8 = vsyncpa [#allocation4], 0
    // Predicated region
    $region2: #{tpu_custom_call.1} parent=1 // pred_check
      _
    $region3: #{tpu_custom_call.1} parent=1 // pred_check_branch
      %10 = sbr.rel (0) target = $region5
    $region4: #{tpu_custom_call.1} parent=1 // pred_region
      %s12 = ssub.s32 3840, 3840
      %13 = vsyncadd [#allocation3], %s12
      %s14 = sshll.u32 [#allocation2], 4
      %s15 = int_to_ptr.vmem [resolvable:$true] %s14
      %20 = dma.hbm_to_vmem [thread:$0]  %s0, 3840, %s15, [#allocation3], 128, 128, 8
    $region5: #{tpu_custom_call.1} parent=1 // pred_fallthru
      _
    // Predicated region
    $region6: #{tpu_custom_call.1} parent=1 // pred_check
      _
    $region7: #{tpu_custom_call.1} parent=1 // pred_check_branch
      %22 = sbr.rel (0) target = $region9
    $region8: #{tpu_custom_call.1} parent=1 // pred_region
      _
    $region9: #{tpu_custom_call.1} parent=1 // pred_fallthru
      _
    // Predicated region
    $region10: #{tpu_custom_call.1} parent=1 // pred_check
      _
    $region11: #{tpu_custom_call.1} parent=1 // pred_check_branch
      %24 = sbr.rel (0) target = $region13
    $region12: #{tpu_custom_call.1} parent=1 // pred_region
      %25 = dma.done [#allocation3], 3840
    $region13: #{tpu_custom_call.1} parent=1 // pred_fallthru
      _
    %v26 = vld [vmem:[%s1] sm:$0x1]
    %v27 = vld [vmem:[#allocation2] sm:$0xff]
    %v28 = vld [vmem:[#allocation2 + $0x8] sm:$0xff]
    %v29 = vld [vmem:[#allocation2 + $0x10] sm:$0xf]
    %v30 = vld [vmem:[#allocation2 + $0x18] sm:$0xff]
    %v31 = vld [vmem:[#allocation2 + $0x20] sm:$0xff]
    %v32 = vld [vmem:[#allocation2 + $0x28] sm:$0xf]
    %v33 = vld [vmem:[#allocation2 + $0x30] sm:$0xff]
    %v34 = vld [vmem:[#allocation2 + $0x38] sm:$0xff]
    %v35 = vld [vmem:[#allocation2 + $0x40] sm:$0xf]
    %v36 = vld [vmem:[#allocation2 + $0x48] sm:$0xff]
    %v37 = vld [vmem:[#allocation2 + $0x50] sm:$0xff]
    %v38 = vld [vmem:[#allocation2 + $0x58] sm:$0xf]
    %v39 = vld [vmem:[#allocation2 + $0x60] sm:$0xff]
    %v40 = vld [vmem:[#allocation2 + $0x68] sm:$0xff]
    %v41 = vld [vmem:[#allocation2 + $0x70] sm:$0xf]
    %v42 = vld [vmem:[#allocation2 + $0x78] sm:$0xff]
    %v43 = vld [vmem:[#allocation2 + $0x80] sm:$0xff]
    %v44 = vld [vmem:[#allocation2 + $0x88] sm:$0xf]
    %v45 = vld [vmem:[#allocation2 + $0x90] sm:$0xff]
    %v46 = vld [vmem:[#allocation2 + $0x98] sm:$0xff]
    %v47 = vld [vmem:[#allocation2 + $0xa0] sm:$0xf]
    %v48 = vld [vmem:[#allocation2 + $0xa8] sm:$0xff]
    %v49 = vld [vmem:[#allocation2 + $0xb0] sm:$0xff]
    %v50 = vld [vmem:[#allocation2 + $0xb8] sm:$0xf]
    %v51 = vld [vmem:[#allocation2 + $0xc0] sm:$0xff]
    %v52 = vld [vmem:[#allocation2 + $0xc8] sm:$0xff]
    %v53 = vld [vmem:[#allocation2 + $0xd0] sm:$0xf]
    %v54 = vld [vmem:[#allocation2 + $0xd8] sm:$0xff]
    %v55 = vld [vmem:[#allocation2 + $0xe0] sm:$0xff]
    %v56 = vld [vmem:[#allocation2 + $0xe8] sm:$0xf]
    %v58 = vlaneseq
    %v59 = vshrl.u32 %v58, 7
    %v60 = vsub.s32 0, %v59
    %v61 = vrot.slane %v26, %v60
    %v63 = vmul.f32 %v27, %v61
    %v64 = vmul.f32 %v28, %v61
    %v65 = vmul.f32 %v29, %v61
    %v66 = vmul.f32 %v30, %v61
    %v67 = vmul.f32 %v31, %v61
    %v68 = vmul.f32 %v32, %v61
    %v69 = vmul.f32 %v33, %v61
    %v70 = vmul.f32 %v34, %v61
    %v71 = vmul.f32 %v35, %v61
    %v72 = vmul.f32 %v36, %v61
    %v73 = vmul.f32 %v37, %v61
    %v74 = vmul.f32 %v38, %v61
    %v75 = vmul.f32 %v39, %v61
    %v76 = vmul.f32 %v40, %v61
    %v77 = vmul.f32 %v41, %v61
    %v78 = vmul.f32 %v42, %v61
    %v79 = vmul.f32 %v43, %v61
    %v80 = vmul.f32 %v44, %v61
    %v81 = vmul.f32 %v45, %v61
    %v82 = vmul.f32 %v46, %v61
    %v83 = vmul.f32 %v47, %v61
    %v84 = vmul.f32 %v48, %v61
    %v85 = vmul.f32 %v49, %v61
    %v86 = vmul.f32 %v50, %v61
    %v87 = vmul.f32 %v51, %v61
    %v88 = vmul.f32 %v52, %v61
    %v89 = vmul.f32 %v53, %v61
    %v90 = vmul.f32 %v54, %v61
    %v91 = vmul.f32 %v55, %v61
    %v92 = vmul.f32 %v56, %v61
    %vm93 = vcmask 408576
    %v94 = vsel %vm93, %v63, 0.0
    %95 = vadd.xlane.f32.xlu0 %v94
    %v96 = vpop.xlane.xlu0 %95
    %v97 = vsel %vm93, %v64, 0.0
    %98 = vadd.xlane.f32.xlu0 %v97
    %v99 = vpop.xlane.xlu0 %98
    %vm100 = vcmask 404480
    %v101 = vsel %vm100, %v65, 0.0
    %102 = vadd.xlane.f32.xlu0 %v101
    %v103 = vpop.xlane.xlu0 %102
    %v104 = vsel %vm93, %v66, 0.0
    %105 = vadd.xlane.f32.xlu0 %v104
    %v106 = vpop.xlane.xlu0 %105
    %v107 = vsel %vm93, %v67, 0.0
    %108 = vadd.xlane.f32.xlu0 %v107
    %v109 = vpop.xlane.xlu0 %108
    %v110 = vsel %vm100, %v68, 0.0
    %111 = vadd.xlane.f32.xlu0 %v110
    %v112 = vpop.xlane.xlu0 %111
    %v113 = vsel %vm93, %v69, 0.0
    %114 = vadd.xlane.f32.xlu0 %v113
    %v115 = vpop.xlane.xlu0 %114
    %v116 = vsel %vm93, %v70, 0.0
    %117 = vadd.xlane.f32.xlu0 %v116
    %v118 = vpop.xlane.xlu0 %117
    %v119 = vsel %vm100, %v71, 0.0
    %120 = vadd.xlane.f32.xlu0 %v119
    %v121 = vpop.xlane.xlu0 %120
    %v122 = vsel %vm93, %v72, 0.0
    %123 = vadd.xlane.f32.xlu0 %v122
    %v124 = vpop.xlane.xlu0 %123
    %v125 = vsel %vm93, %v73, 0.0
    %126 = vadd.xlane.f32.xlu0 %v125
    %v127 = vpop.xlane.xlu0 %126
    %v128 = vsel %vm100, %v74, 0.0
    %129 = vadd.xlane.f32.xlu0 %v128
    %v130 = vpop.xlane.xlu0 %129
    %v131 = vsel %vm93, %v75, 0.0
    %132 = vadd.xlane.f32.xlu0 %v131
    %v133 = vpop.xlane.xlu0 %132
    %v134 = vsel %vm93, %v76, 0.0
    %135 = vadd.xlane.f32.xlu0 %v134
    %v136 = vpop.xlane.xlu0 %135
    %v137 = vsel %vm100, %v77, 0.0
    %138 = vadd.xlane.f32.xlu0 %v137
    %v139 = vpop.xlane.xlu0 %138
    %v140 = vsel %vm93, %v78, 0.0
    %141 = vadd.xlane.f32.xlu0 %v140
    %v142 = vpop.xlane.xlu0 %141
    %v143 = vsel %vm93, %v79, 0.0
    %144 = vadd.xlane.f32.xlu0 %v143
    %v145 = vpop.xlane.xlu0 %144
    %v146 = vsel %vm100, %v80, 0.0
    %147 = vadd.xlane.f32.xlu0 %v146
    %v148 = vpop.xlane.xlu0 %147
    %v149 = vsel %vm93, %v81, 0.0
    %150 = vadd.xlane.f32.xlu0 %v149
    %v151 = vpop.xlane.xlu0 %150
    %v152 = vsel %vm93, %v82, 0.0
    %153 = vadd.xlane.f32.xlu0 %v152
    %v154 = vpop.xlane.xlu0 %153
    %v155 = vsel %vm100, %v83, 0.0
    %156 = vadd.xlane.f32.xlu0 %v155
    %v157 = vpop.xlane.xlu0 %156
    %v158 = vsel %vm93, %v84, 0.0
    %159 = vadd.xlane.f32.xlu0 %v158
    %v160 = vpop.xlane.xlu0 %159
    %v161 = vsel %vm93, %v85, 0.0
    %162 = vadd.xlane.f32.xlu0 %v161
    %v163 = vpop.xlane.xlu0 %162
    %v164 = vsel %vm100, %v86, 0.0
    %165 = vadd.xlane.f32.xlu0 %v164
    %v166 = vpop.xlane.xlu0 %165
    %v167 = vsel %vm93, %v87, 0.0
    %168 = vadd.xlane.f32.xlu0 %v167
    %v169 = vpop.xlane.xlu0 %168
    %v170 = vsel %vm93, %v88, 0.0
    %171 = vadd.xlane.f32.xlu0 %v170
    %v172 = vpop.xlane.xlu0 %171
    %v173 = vsel %vm100, %v89, 0.0
    %174 = vadd.xlane.f32.xlu0 %v173
    %v175 = vpop.xlane.xlu0 %174
    %v176 = vsel %vm93, %v90, 0.0
    %177 = vadd.xlane.f32.xlu0 %v176
    %v178 = vpop.xlane.xlu0 %177
    %v179 = vsel %vm93, %v91, 0.0
    %180 = vadd.xlane.f32.xlu0 %v179
    %v181 = vpop.xlane.xlu0 %180
    %v182 = vsel %vm100, %v92, 0.0
    %183 = vadd.xlane.f32.xlu0 %v182
    %v184 = vpop.xlane.xlu0 %183
    %v185 = vmax.f32 %v96, %v99
    %vm186 = vcmask 1043456
    %v187 = vsel %vm186, %v103, -inf
    %v188 = vmax.f32 %v185, %v187
    %v189 = vrot.slane %v188, 4
    %v190 = vmax.f32 %v188, %v189
    %v191 = vrot.slane %v190, 2
    %v192 = vmax.f32 %v190, %v191
    %v193 = vrot.slane %v192, 1
    %v194 = vmax.f32 %v192, %v193
    %v195 = vmax.f32 %v106, %v109
    %v196 = vsel %vm186, %v112, -inf
    %v197 = vmax.f32 %v195, %v196
    %v198 = vrot.slane %v197, 4
    %v199 = vmax.f32 %v197, %v198
    %v200 = vrot.slane %v199, 2
    %v201 = vmax.f32 %v199, %v200
    %v202 = vrot.slane %v201, 1
    %v203 = vmax.f32 %v201, %v202
    %v204 = vmax.f32 %v115, %v118
    %v205 = vsel %vm186, %v121, -inf
    %v206 = vmax.f32 %v204, %v205
    %v207 = vrot.slane %v206, 4
    %v208 = vmax.f32 %v206, %v207
    %v209 = vrot.slane %v208, 2
    %v210 = vmax.f32 %v208, %v209
    %v211 = vrot.slane %v210, 1
    %v212 = vmax.f32 %v210, %v211
    %v213 = vmax.f32 %v124, %v127
    %v214 = vsel %vm186, %v130, -inf
    %v215 = vmax.f32 %v213, %v214
    %v216 = vrot.slane %v215, 4
    %v217 = vmax.f32 %v215, %v216
    %v218 = vrot.slane %v217, 2
    %v219 = vmax.f32 %v217, %v218
    %v220 = vrot.slane %v219, 1
    %v221 = vmax.f32 %v219, %v220
    %v222 = vmax.f32 %v133, %v136
    %v223 = vsel %vm186, %v139, -inf
    %v224 = vmax.f32 %v222, %v223
    %v225 = vrot.slane %v224, 4
    %v226 = vmax.f32 %v224, %v225
    %v227 = vrot.slane %v226, 2
    %v228 = vmax.f32 %v226, %v227
    %v229 = vrot.slane %v228, 1
    %v230 = vmax.f32 %v228, %v229
    %v231 = vmax.f32 %v142, %v145
    %v232 = vsel %vm186, %v148, -inf
    %v233 = vmax.f32 %v231, %v232
    %v234 = vrot.slane %v233, 4
    %v235 = vmax.f32 %v233, %v234
    %v236 = vrot.slane %v235, 2
    %v237 = vmax.f32 %v235, %v236
    %v238 = vrot.slane %v237, 1
    %v239 = vmax.f32 %v237, %v238
    %v240 = vmax.f32 %v151, %v154
    %v241 = vsel %vm186, %v157, -inf
    %v242 = vmax.f32 %v240, %v241
    %v243 = vrot.slane %v242, 4
    %v244 = vmax.f32 %v242, %v243
    %v245 = vrot.slane %v244, 2
    %v246 = vmax.f32 %v244, %v245
    %v247 = vrot.slane %v246, 1
    %v248 = vmax.f32 %v246, %v247
    %v249 = vmax.f32 %v160, %v163
    %v250 = vsel %vm186, %v166, -inf
    %v251 = vmax.f32 %v249, %v250
    %v252 = vrot.slane %v251, 4
    %v253 = vmax.f32 %v251, %v252
    %v254 = vrot.slane %v253, 2
    %v255 = vmax.f32 %v253, %v254
    %v256 = vrot.slane %v255, 1
    %v257 = vmax.f32 %v255, %v256
    %v258 = vmax.f32 %v169, %v172
    %v259 = vsel %vm186, %v175, -inf
    %v260 = vmax.f32 %v258, %v259
    %v261 = vrot.slane %v260, 4
    %v262 = vmax.f32 %v260, %v261
    %v263 = vrot.slane %v262, 2
    %v264 = vmax.f32 %v262, %v263
    %v265 = vrot.slane %v264, 1
    %v266 = vmax.f32 %v264, %v265
    %v267 = vmax.f32 %v178, %v181
    %v268 = vsel %vm186, %v184, -inf
    %v269 = vmax.f32 %v267, %v268
    %v270 = vrot.slane %v269, 4
    %v271 = vmax.f32 %v269, %v270
    %v272 = vrot.slane %v271, 2
    %v273 = vmax.f32 %v271, %v272
    %v274 = vrot.slane %v273, 1
    %v275 = vmax.f32 %v273, %v274
    %v276 = vsub.f32 %v96, %v194
    %v277 = vsub.f32 %v99, %v194
    %v278 = vsub.f32 %v103, %v194
    %v279 = vsub.f32 %v106, %v203
    %v280 = vsub.f32 %v109, %v203
    %v281 = vsub.f32 %v112, %v203
    %v282 = vsub.f32 %v115, %v212
    %v283 = vsub.f32 %v118, %v212
    %v284 = vsub.f32 %v121, %v212
    %v285 = vsub.f32 %v124, %v221
    %v286 = vsub.f32 %v127, %v221
    %v287 = vsub.f32 %v130, %v221
    %v288 = vsub.f32 %v133, %v230
    %v289 = vsub.f32 %v136, %v230
    %v290 = vsub.f32 %v139, %v230
    %v291 = vsub.f32 %v142, %v239
    %v292 = vsub.f32 %v145, %v239
    %v293 = vsub.f32 %v148, %v239
    %v294 = vsub.f32 %v151, %v248
    %v295 = vsub.f32 %v154, %v248
    %v296 = vsub.f32 %v157, %v248
    %v297 = vsub.f32 %v160, %v257
    %v298 = vsub.f32 %v163, %v257
    %v299 = vsub.f32 %v166, %v257
    %v300 = vsub.f32 %v169, %v266
    %v301 = vsub.f32 %v172, %v266
    %v302 = vsub.f32 %v175, %v266
    %v303 = vsub.f32 %v178, %v275
    %v304 = vsub.f32 %v181, %v275
    %v305 = vsub.f32 %v184, %v275
    %v306 = vmul.f32 %v276, 1.442695
    %v307 = vpow.pop %v306
    %v308 = vmul.f32 %v277, 1.442695
    %v309 = vpow.pop %v308
    %v310 = vmul.f32 %v278, 1.442695
    %v311 = vpow.pop %v310
    %v312 = vmul.f32 %v279, 1.442695
    %v313 = vpow.pop %v312
    %v314 = vmul.f32 %v280, 1.442695
    %v315 = vpow.pop %v314
    %v316 = vmul.f32 %v281, 1.442695
    %v317 = vpow.pop %v316
    %v318 = vmul.f32 %v282, 1.442695
    %v319 = vpow.pop %v318
    %v320 = vmul.f32 %v283, 1.442695
    %v321 = vpow.pop %v320
    %v322 = vmul.f32 %v284, 1.442695
    %v323 = vpow.pop %v322
    %v324 = vmul.f32 %v285, 1.442695
    %v325 = vpow.pop %v324
    %v326 = vmul.f32 %v286, 1.442695
    %v327 = vpow.pop %v326
    %v328 = vmul.f32 %v287, 1.442695
    %v329 = vpow.pop %v328
    %v330 = vmul.f32 %v288, 1.442695
    %v331 = vpow.pop %v330
    %v332 = vmul.f32 %v289, 1.442695
    %v333 = vpow.pop %v332
    %v334 = vmul.f32 %v290, 1.442695
    %v335 = vpow.pop %v334
    %v336 = vmul.f32 %v291, 1.442695
    %v337 = vpow.pop %v336
    %v338 = vmul.f32 %v292, 1.442695
    %v339 = vpow.pop %v338
    %v340 = vmul.f32 %v293, 1.442695
    %v341 = vpow.pop %v340
    %v342 = vmul.f32 %v294, 1.442695
    %v343 = vpow.pop %v342
    %v344 = vmul.f32 %v295, 1.442695
    %v345 = vpow.pop %v344
    %v346 = vmul.f32 %v296, 1.442695
    %v347 = vpow.pop %v346
    %v348 = vmul.f32 %v297, 1.442695
    %v349 = vpow.pop %v348
    %v350 = vmul.f32 %v298, 1.442695
    %v351 = vpow.pop %v350
    %v352 = vmul.f32 %v299, 1.442695
    %v353 = vpow.pop %v352
    %v354 = vmul.f32 %v300, 1.442695
    %v355 = vpow.pop %v354
    %v356 = vmul.f32 %v301, 1.442695
    %v357 = vpow.pop %v356
    %v358 = vmul.f32 %v302, 1.442695
    %v359 = vpow.pop %v358
    %v360 = vmul.f32 %v303, 1.442695
    %v361 = vpow.pop %v360
    %v362 = vmul.f32 %v304, 1.442695
    %v363 = vpow.pop %v362
    %v364 = vmul.f32 %v305, 1.442695
    %v365 = vpow.pop %v364
    %v366 = vadd.f32 %v307, %v309
    %v367 = vsel %vm186, %v311, 0.0
    %v368 = vadd.f32 %v366, %v367
    %v369 = vrot.slane %v368, 4
    %v370 = vadd.f32 %v368, %v369
    %v371 = vrot.slane %v370, 2
    %v372 = vadd.f32 %v370, %v371
    %v373 = vrot.slane %v372, 1
    %v374 = vadd.f32 %v372, %v373
    %v375 = vadd.f32 %v313, %v315
    %v376 = vsel %vm186, %v317, 0.0
    %v377 = vadd.f32 %v375, %v376
    %v378 = vrot.slane %v377, 4
    %v379 = vadd.f32 %v377, %v378
    %v380 = vrot.slane %v379, 2
    %v381 = vadd.f32 %v379, %v380
    %v382 = vrot.slane %v381, 1
    %v383 = vadd.f32 %v381, %v382
    %v384 = vadd.f32 %v319, %v321
    %v385 = vsel %vm186, %v323, 0.0
    %v386 = vadd.f32 %v384, %v385
    %v387 = vrot.slane %v386, 4
    %v388 = vadd.f32 %v386, %v387
    %v389 = vrot.slane %v388, 2
    %v390 = vadd.f32 %v388, %v389
    %v391 = vrot.slane %v390, 1
    %v392 = vadd.f32 %v390, %v391
    %v393 = vadd.f32 %v325, %v327
    %v394 = vsel %vm186, %v329, 0.0
    %v395 = vadd.f32 %v393, %v394
    %v396 = vrot.slane %v395, 4
    %v397 = vadd.f32 %v395, %v396
    %v398 = vrot.slane %v397, 2
    %v399 = vadd.f32 %v397, %v398
    %v400 = vrot.slane %v399, 1
    %v401 = vadd.f32 %v399, %v400
    %v402 = vadd.f32 %v331, %v333
    %v403 = vsel %vm186, %v335, 0.0
    %v404 = vadd.f32 %v402, %v403
    %v405 = vrot.slane %v404, 4
    %v406 = vadd.f32 %v404, %v405
    %v407 = vrot.slane %v406, 2
    %v408 = vadd.f32 %v406, %v407
    %v409 = vrot.slane %v408, 1
    %v410 = vadd.f32 %v408, %v409
    %v411 = vadd.f32 %v337, %v339
    %v412 = vsel %vm186, %v341, 0.0
    %v413 = vadd.f32 %v411, %v412
    %v414 = vrot.slane %v413, 4
    %v415 = vadd.f32 %v413, %v414
    %v416 = vrot.slane %v415, 2
    %v417 = vadd.f32 %v415, %v416
    %v418 = vrot.slane %v417, 1
    %v419 = vadd.f32 %v417, %v418
    %v420 = vadd.f32 %v343, %v345
    %v421 = vsel %vm186, %v347, 0.0
    %v422 = vadd.f32 %v420, %v421
    %v423 = vrot.slane %v422, 4
    %v424 = vadd.f32 %v422, %v423
    %v425 = vrot.slane %v424, 2
    %v426 = vadd.f32 %v424, %v425
    %v427 = vrot.slane %v426, 1
    %v428 = vadd.f32 %v426, %v427
    %v429 = vadd.f32 %v349, %v351
    %v430 = vsel %vm186, %v353, 0.0
    %v431 = vadd.f32 %v429, %v430
    %v432 = vrot.slane %v431, 4
    %v433 = vadd.f32 %v431, %v432
    %v434 = vrot.slane %v433, 2
    %v435 = vadd.f32 %v433, %v434
    %v436 = vrot.slane %v435, 1
    %v437 = vadd.f32 %v435, %v436
    %v438 = vadd.f32 %v355, %v357
    %v439 = vsel %vm186, %v359, 0.0
    %v440 = vadd.f32 %v438, %v439
    %v441 = vrot.slane %v440, 4
    %v442 = vadd.f32 %v440, %v441
    %v443 = vrot.slane %v442, 2
    %v444 = vadd.f32 %v442, %v443
    %v445 = vrot.slane %v444, 1
    %v446 = vadd.f32 %v444, %v445
    %v447 = vadd.f32 %v361, %v363
    %v448 = vsel %vm186, %v365, 0.0
    %v449 = vadd.f32 %v447, %v448
    %v450 = vrot.slane %v449, 4
    %v451 = vadd.f32 %v449, %v450
    %v452 = vrot.slane %v451, 2
    %v453 = vadd.f32 %v451, %v452
    %v454 = vrot.slane %v453, 1
    %v455 = vadd.f32 %v453, %v454
    %v456 = vmul.f32 %v27, %v307
    %v457 = vmul.f32 %v28, %v309
    %v458 = vmul.f32 %v29, %v311
    %v459 = vmul.f32 %v30, %v313
    %v460 = vmul.f32 %v31, %v315
    %v461 = vmul.f32 %v32, %v317
    %v462 = vmul.f32 %v33, %v319
    %v463 = vmul.f32 %v34, %v321
    %v464 = vmul.f32 %v35, %v323
    %v465 = vmul.f32 %v36, %v325
    %v466 = vmul.f32 %v37, %v327
    %v467 = vmul.f32 %v38, %v329
    %v468 = vmul.f32 %v39, %v331
    %v469 = vmul.f32 %v40, %v333
    %v470 = vmul.f32 %v41, %v335
    %v471 = vmul.f32 %v42, %v337
    %v472 = vmul.f32 %v43, %v339
    %v473 = vmul.f32 %v44, %v341
    %v474 = vmul.f32 %v45, %v343
    %v475 = vmul.f32 %v46, %v345
    %v476 = vmul.f32 %v47, %v347
    %v477 = vmul.f32 %v48, %v349
    %v478 = vmul.f32 %v49, %v351
    %v479 = vmul.f32 %v50, %v353
    %v480 = vmul.f32 %v51, %v355
    %v481 = vmul.f32 %v52, %v357
    %v482 = vmul.f32 %v53, %v359
    %v483 = vmul.f32 %v54, %v361
    %v484 = vmul.f32 %v55, %v363
    %v485 = vmul.f32 %v56, %v365
    %v486 = vsel %vm93, %v456, 0.0
    %v487 = vsel %vm93, %v457, 0.0
    %v488 = vadd.f32 %v486, %v487
    %v489 = vsel %vm100, %v458, 0.0
    %v490 = vadd.f32 %v488, %v489
    %v491 = vrot.slane %v490, 4
    %v492 = vadd.f32 %v490, %v491
    %v493 = vrot.slane %v492, 2
    %v494 = vadd.f32 %v492, %v493
    %v495 = vrot.slane %v494, 1
    %v496 = vadd.f32 %v494, %v495
    %v497 = vsel %vm93, %v459, 0.0
    %v498 = vsel %vm93, %v460, 0.0
    %v499 = vadd.f32 %v497, %v498
    %v500 = vsel %vm100, %v461, 0.0
    %v501 = vadd.f32 %v499, %v500
    %v502 = vrot.slane %v501, 4
    %v503 = vadd.f32 %v501, %v502
    %v504 = vrot.slane %v503, 2
    %v505 = vadd.f32 %v503, %v504
    %v506 = vrot.slane %v505, 1
    %v507 = vadd.f32 %v505, %v506
    %v508 = vsel %vm93, %v462, 0.0
    %v509 = vsel %vm93, %v463, 0.0
    %v510 = vadd.f32 %v508, %v509
    %v511 = vsel %vm100, %v464, 0.0
    %v512 = vadd.f32 %v510, %v511
    %v513 = vrot.slane %v512, 4
    %v514 = vadd.f32 %v512, %v513
    %v515 = vrot.slane %v514, 2
    %v516 = vadd.f32 %v514, %v515
    %v517 = vrot.slane %v516, 1
    %v518 = vadd.f32 %v516, %v517
    %v519 = vsel %vm93, %v465, 0.0
    %v520 = vsel %vm93, %v466, 0.0
    %v521 = vadd.f32 %v519, %v520
    %v522 = vsel %vm100, %v467, 0.0
    %v523 = vadd.f32 %v521, %v522
    %v524 = vrot.slane %v523, 4
    %v525 = vadd.f32 %v523, %v524
    %v526 = vrot.slane %v525, 2
    %v527 = vadd.f32 %v525, %v526
    %v528 = vrot.slane %v527, 1
    %v529 = vadd.f32 %v527, %v528
    %v530 = vsel %vm93, %v468, 0.0
    %v531 = vsel %vm93, %v469, 0.0
    %v532 = vadd.f32 %v530, %v531
    %v533 = vsel %vm100, %v470, 0.0
    %v534 = vadd.f32 %v532, %v533
    %v535 = vrot.slane %v534, 4
    %v536 = vadd.f32 %v534, %v535
    %v537 = vrot.slane %v536, 2
    %v538 = vadd.f32 %v536, %v537
    %v539 = vrot.slane %v538, 1
    %v540 = vadd.f32 %v538, %v539
    %v541 = vsel %vm93, %v471, 0.0
    %v542 = vsel %vm93, %v472, 0.0
    %v543 = vadd.f32 %v541, %v542
    %v544 = vsel %vm100, %v473, 0.0
    %v545 = vadd.f32 %v543, %v544
    %v546 = vrot.slane %v545, 4
    %v547 = vadd.f32 %v545, %v546
    %v548 = vrot.slane %v547, 2
    %v549 = vadd.f32 %v547, %v548
    %v550 = vrot.slane %v549, 1
    %v551 = vadd.f32 %v549, %v550
    %v552 = vsel %vm93, %v474, 0.0
    %v553 = vsel %vm93, %v475, 0.0
    %v554 = vadd.f32 %v552, %v553
    %v555 = vsel %vm100, %v476, 0.0
    %v556 = vadd.f32 %v554, %v555
    %v557 = vrot.slane %v556, 4
    %v558 = vadd.f32 %v556, %v557
    %v559 = vrot.slane %v558, 2
    %v560 = vadd.f32 %v558, %v559
    %v561 = vrot.slane %v560, 1
    %v562 = vadd.f32 %v560, %v561
    %v563 = vsel %vm93, %v477, 0.0
    %v564 = vsel %vm93, %v478, 0.0
    %v565 = vadd.f32 %v563, %v564
    %v566 = vsel %vm100, %v479, 0.0
    %v567 = vadd.f32 %v565, %v566
    %v568 = vrot.slane %v567, 4
    %v569 = vadd.f32 %v567, %v568
    %v570 = vrot.slane %v569, 2
    %v571 = vadd.f32 %v569, %v570
    %v572 = vrot.slane %v571, 1
    %v573 = vadd.f32 %v571, %v572
    %v574 = vsel %vm93, %v480, 0.0
    %v575 = vsel %vm93, %v481, 0.0
    %v576 = vadd.f32 %v574, %v575
    %v577 = vsel %vm100, %v482, 0.0
    %v578 = vadd.f32 %v576, %v577
    %v579 = vrot.slane %v578, 4
    %v580 = vadd.f32 %v578, %v579
    %v581 = vrot.slane %v580, 2
    %v582 = vadd.f32 %v580, %v581
    %v583 = vrot.slane %v582, 1
    %v584 = vadd.f32 %v582, %v583
    %v585 = vsel %vm93, %v483, 0.0
    %v586 = vsel %vm93, %v484, 0.0
    %v587 = vadd.f32 %v585, %v586
    %v588 = vsel %vm100, %v485, 0.0
    %v589 = vadd.f32 %v587, %v588
    %v590 = vrot.slane %v589, 4
    %v591 = vadd.f32 %v589, %v590
    %v592 = vrot.slane %v591, 2
    %v593 = vadd.f32 %v591, %v592
    %v594 = vrot.slane %v593, 1
    %v595 = vadd.f32 %v593, %v594
    %v596 = vrcp.pop %v374
    %v597 = vmul.f32 %v496, %v596
    %v598 = vrcp.pop %v383
    %v599 = vmul.f32 %v507, %v598
    %v600 = vrcp.pop %v392
    %v601 = vmul.f32 %v518, %v600
    %v602 = vrcp.pop %v401
    %v603 = vmul.f32 %v529, %v602
    %v604 = vrcp.pop %v410
    %v605 = vmul.f32 %v540, %v604
    %v606 = vrcp.pop %v419
    %v607 = vmul.f32 %v551, %v606
    %v608 = vrcp.pop %v428
    %v609 = vmul.f32 %v562, %v608
    %v610 = vrcp.pop %v437
    %v611 = vmul.f32 %v573, %v610
    %v612 = vrcp.pop %v446
    %v613 = vmul.f32 %v584, %v612
    %v614 = vrcp.pop %v455
    %v615 = vmul.f32 %v595, %v614
    %vm626 = vcmask 1041409
    %v627 = vsel %vm626, %v599, %v597
    %vm628 = vcmask 1042434
    %v629 = vsel %vm628, %v601, %v627
    %vm630 = vcmask 1043459
    %v631 = vsel %vm630, %v603, %v629
    %vm632 = vcmask 1044484
    %v633 = vsel %vm632, %v605, %v631
    %vm634 = vcmask 1045509
    %v635 = vsel %vm634, %v607, %v633
    %vm636 = vcmask 1046534
    %v637 = vsel %vm636, %v609, %v635
    %vm638 = vcmask 1047559
    %v639 = vsel %vm638, %v611, %v637
    %v640 = vsel %vm626, %v615, %v613
    %643 = vst.msk [vmem:[#allocation5] sm:$0xff] %vm93, %v639
    %vm644 = vcmask 402432
    %645 = vst.msk [vmem:[#allocation5 + $0x8] sm:$0x3] %vm644, %v640
    // Predicated region
    $region14: #{tpu_custom_call.1} parent=1 // pred_check
      _
    $region15: #{tpu_custom_call.1} parent=1 // pred_check_branch
      %647 = sbr.rel (0) target = $region17
    $region16: #{tpu_custom_call.1} parent=1 // pred_region
      %s649 = ssub.s32 256, 256
      %650 = vsyncadd [#allocation4], %s649
      %s651 = sshll.u32 [#allocation5], 4
      %s652 = int_to_ptr.vmem [resolvable:$true] %s651
      %657 = dma.vmem_to_hbm [thread:$0]  %s652, 256, %s2, [#allocation4], 128, 128, 8
    $region17: #{tpu_custom_call.1} parent=1 // pred_fallthru
      _
    // Predicated region
    $region18: #{tpu_custom_call.1} parent=1 // pred_check
      _
    $region19: #{tpu_custom_call.1} parent=1 // pred_check_branch
      %659 = sbr.rel (0) target = $region21
    $region20: #{tpu_custom_call.1} parent=1 // pred_region
      %660 = dma.done [#allocation4], 256
    $region21: #{tpu_custom_call.1} parent=1 // pred_fallthru
      _
    %661 = vsyncpa [#allocation3], 1
    %662 = vsyncpa [#allocation4], 1

</llo_original>
